<compile_context>
chip_gen: v7x
topology: tpu7x:2x2x1
jax: 0.10.0
libtpu: 0.0.40
codegen_flags: <defaults>
</compile_context>

<pallas_src>
import jax
import jax.numpy as jnp
from jax.experimental import pallas as pl
from jax.experimental.pallas import tpu as pltpu


# -----------------------------------------------------------------------------
# Kernel: fused  relu(latent @ Wh + bh) @ Wo + bo
# -----------------------------------------------------------------------------
def decoder_kernel(latent_ref, w_h_ref, b_h_ref, w_o_ref, b_o_ref, out_ref):
    # Hidden layer (the only one that reaches the output) + ReLU.
    h = jnp.dot(latent_ref[...], w_h_ref[...],
                preferred_element_type=jnp.float32) + b_h_ref[...]
    x = jnp.maximum(h, 0.0)                      # ReLU; Dropout(eval) == identity
    # Output projection.
    out = jnp.dot(x.astype(w_o_ref.dtype), w_o_ref[...],
                  preferred_element_type=jnp.float32) + b_o_ref[...]
    out_ref[...] = out.astype(out_ref.dtype)


# -----------------------------------------------------------------------------
# Wrapper
# -----------------------------------------------------------------------------
def decoder_forward(latent, hidden_params, out_params):
    """latent: (B, latent_dim); hidden_params: list of (W, b); out_params: (W, b).

    W matrices are (in_dim, out_dim); biases are (out_dim,).
    Only hidden_params[-1] is used — earlier layers are dead in the module's
    forward, so their weights are never shipped to the kernel.
    """
    w_h, b_h = hidden_params[-1]
    w_out, b_out = out_params
    batch, _ = latent.shape
    out_dim = w_out.shape[1]

    # Lane-dense output: pad the final out dim up to a multiple of 128 so the
    # store lowers to unmasked vst; slice back afterwards (tiny copy).
    pad = (-out_dim) % 128
    if pad:
        w_out = jnp.pad(w_out, ((0, 0), (0, pad)))
        b_out = jnp.pad(b_out, ((0, pad),))
    padded_out = out_dim + pad

    # Biases presented as (1, H) so every kernel ref is 2-D (hoisted broadcast).
    args = (latent, w_h, b_h.reshape(1, -1), w_out, b_out.reshape(1, -1))

    vmem = pltpu.MemorySpace.VMEM
    out = pl.pallas_call(
        decoder_kernel,
        out_shape=jax.ShapeDtypeStruct((batch, padded_out), latent.dtype),
        in_specs=[pl.BlockSpec(memory_space=vmem) for _ in args],
        out_specs=pl.BlockSpec(memory_space=vmem),
    )(*args)
    # NOTE: for large batch on v7x, add a "parallel" batch grid axis with
    # constant-index weight BlockSpecs; unnecessary at this scale.

    if pad:
        out = out[:, :out_dim]
    return out


# -----------------------------------------------------------------------------
# Deterministic parameter init (PyTorch nn.Linear default: U(-k, k), k=1/sqrt(fan_in))
# -----------------------------------------------------------------------------
def _init_linear(key, in_dim, out_dim, dtype=jnp.float32):
    kw, kb = jax.random.split(key)
    bound = 1.0 / jnp.sqrt(jnp.float32(in_dim))
    w = jax.random.uniform(kw, (in_dim, out_dim), dtype, -bound, bound)
    b = jax.random.uniform(kb, (out_dim,), dtype, -bound, bound)
    return w, b


def _reference_forward(latent, hidden_params, out_params):
    """Pure-JAX reference replicating the PyTorch loop exactly (all layers)."""
    x = latent
    for w, b in hidden_params:
        x = jnp.maximum(latent @ w + b, 0.0)   # each layer applied to original latent
    w_out, b_out = out_params
    return x @ w_out + b_out


# -----------------------------------------------------------------------------
# Main
# -----------------------------------------------------------------------------
if __name__ == "__main__":
    batch = 8
    latent_dim = 32
    decoder_dims = [32, 32, 48]   # model_infos['decoder_dims']
    input_dim = 64                # args.input_dim
    # drop_out irrelevant in eval mode.

    # The PyTorch forward feeds `latent` to every hidden layer, so the module
    # only runs if every non-final hidden layer's fan-out equals latent_dim.
    assert all(d == latent_dim for d in decoder_dims[:-1]), (
        "decoder_dims[:-1] must equal latent_dim for the original module's "
        "forward to be well-formed"
    )

    key = jax.random.PRNGKey(0)
    keys = jax.random.split(key, len(decoder_dims) + 2)

    hidden_params = []
    cur_dim = latent_dim
    for i, d in enumerate(decoder_dims):
        hidden_params.append(_init_linear(keys[i], cur_dim, d))
        cur_dim = d
    out_params = _init_linear(keys[len(decoder_dims)], cur_dim, input_dim)

    latent = jax.random.normal(keys[-1], (batch, latent_dim), jnp.float32)

    out = decoder_forward(latent, hidden_params, out_params)
    out = jax.block_until_ready(out)

    ref = _reference_forward(latent, hidden_params, out_params)
    assert out.shape == (batch, input_dim), out.shape
    assert jnp.allclose(out, ref, atol=1e-5, rtol=1e-5), (
        float(jnp.max(jnp.abs(out - ref)))
    )

    print("KERNEL_OK")
</pallas_src>

<mosaic_0001>
module attributes {stable_mosaic.version = 11 : i64} {
  func.func @decoder_kernel(%arg0: memref<8x32xf32, #tpu.memory_space<vmem>>, %arg1: memref<32x48xf32, #tpu.memory_space<vmem>>, %arg2: memref<1x48xf32, #tpu.memory_space<vmem>>, %arg3: memref<48x128xf32, #tpu.memory_space<vmem>>, %arg4: memref<1x128xf32, #tpu.memory_space<vmem>>, %arg5: memref<8x128xf32, #tpu.memory_space<vmem>>) attributes {dimension_semantics = [], scalar_prefetch = 0 : i64, scratch_operands = 0 : i64, tpu.core_type = #tpu.core_type<tc>} {
    %c0 = arith.constant 0 : index
    %c0_0 = arith.constant 0 : index
    %0 = vector.load %arg0[%c0, %c0_0] : memref<8x32xf32, #tpu.memory_space<vmem>>, vector<8x32xf32>
    %c0_1 = arith.constant 0 : index
    %c0_2 = arith.constant 0 : index
    %1 = vector.load %arg1[%c0_1, %c0_2] : memref<32x48xf32, #tpu.memory_space<vmem>>, vector<32x48xf32>
    %cst = arith.constant dense<0.000000e+00> : vector<8x48xf32>
    %2 = tpu.matmul %0, %1, %cst {dimension_numbers = #tpu.dot_dimension_numbers<[1], [0], [0], [1], [0, 0, 1, 1], [], []>} : vector<8x32xf32>, vector<32x48xf32>, vector<8x48xf32> -> vector<8x48xf32>
    %c0_3 = arith.constant 0 : index
    %c0_4 = arith.constant 0 : index
    %3 = vector.load %arg2[%c0_3, %c0_4] : memref<1x48xf32, #tpu.memory_space<vmem>>, vector<1x48xf32>
    %4 = vector.broadcast %3 : vector<1x48xf32> to vector<8x48xf32>
    %5 = arith.addf %2, %4 : vector<8x48xf32>
    %cst_5 = arith.constant 0.000000e+00 : f32
    %6 = vector.broadcast %cst_5 : f32 to vector<8x48xf32>
    %7 = arith.maximumf %5, %6 : vector<8x48xf32>
    %c0_6 = arith.constant 0 : index
    %c0_7 = arith.constant 0 : index
    %8 = vector.load %arg3[%c0_6, %c0_7] : memref<48x128xf32, #tpu.memory_space<vmem>>, vector<48x128xf32>
    %cst_8 = arith.constant dense<0.000000e+00> : vector<8x128xf32>
    %9 = tpu.matmul %7, %8, %cst_8 {dimension_numbers = #tpu.dot_dimension_numbers<[1], [0], [0], [1], [0, 0, 1, 1], [], []>} : vector<8x48xf32>, vector<48x128xf32>, vector<8x128xf32> -> vector<8x128xf32>
    %c0_9 = arith.constant 0 : index
    %c0_10 = arith.constant 0 : index
    %10 = vector.load %arg4[%c0_9, %c0_10] : memref<1x128xf32, #tpu.memory_space<vmem>>, vector<1x128xf32>
    %11 = vector.broadcast %10 : vector<1x128xf32> to vector<8x128xf32>
    %12 = arith.addf %9, %11 : vector<8x128xf32>
    %c0_11 = arith.constant 0 : index
    %c0_12 = arith.constant 0 : index
    %13 = vector.load %arg5[%c0_11, %c0_12] : memref<8x128xf32, #tpu.memory_space<vmem>>, vector<8x128xf32>
    tpu.vector_store %arg5[%c0_11, %c0_12], %12 {strides = array<i32>} : memref<8x128xf32, #tpu.memory_space<vmem>>, vector<8x128xf32>,
    return
  }
}

</mosaic_0001>

<llo_original>
// kernel: tpu_custom_call.1
$region0: #{tpu_custom_call.1}
  #allocation0 [shape = 'u32[]', space=smem, size = 0x4, offset = 0x4, fixed_abs, tag = 'smem constant byte address 0x4 - core index']
  #allocation1 [shape = 'u32[144,128]{1,0:T(1,128)}', space=vmem, size = 0x12000, scoped, tag = 'internal scratch']
  %s0 = inlined_call_operand.hbm [shape: f32[8,32], index: 0, kind: input, shape index: {}]
  %s1 = inlined_call_operand.hbm [shape: f32[32,48], index: 1, kind: input, shape index: {}]
  %s2 = inlined_call_operand.vmem [shape: f32[1,48], index: 2, kind: input, shape index: {}]
  %s3 = inlined_call_operand.hbm [shape: f32[48,128], index: 3, kind: input, shape index: {}]
  %s4 = inlined_call_operand.vmem [shape: f32[1,128], index: 4, kind: input, shape index: {}]
  %s5 = inlined_call_operand.hbm [shape: f32[8,128], index: 5, kind: output, shape index: {}]
  %s6 = sld [smem:[#allocation0]]
  $region42: #{tpu_custom_call.1} parent=0
    _
  %s8 = ssub.s32 1, %s6
  %s9 = scalar_select 0, %s8, %s6
  $region1: #{tpu_custom_call.1} parent=0
    #allocation2 [shape = 'u8[4096]{0}', space=vmem, size = 0x1000, scoped, tag = 'input window, operand 0, single buffered']
    #allocation3 [shape = 's32[1]{0}', space=sflag, size = 0x4, scoped, tag = 'scoped memory for tpu_custom_call.1']
    #allocation4 [shape = 's32[1]{0}', space=sflag, size = 0x4, scoped, tag = 'scoped memory for tpu_custom_call.1']
    #allocation5 [shape = 'u8[16384]{0}', space=vmem, size = 0x4000, scoped, tag = 'input window, operand 1, single buffered']
    #allocation6 [shape = 's32[1]{0}', space=sflag, size = 0x4, scoped, tag = 'scoped memory for tpu_custom_call.1']
    #allocation7 [shape = 'u8[24576]{0}', space=vmem, size = 0x6000, scoped, tag = 'input window, operand 3, single buffered']
    #allocation8 [shape = 'u8[4096]{0}', space=vmem, size = 0x1000, scoped, tag = 'output window, operand 0, single buffered']
    %10 = vsyncpa [#allocation3], 0
    %11 = vsyncpa [#allocation6], 0
    %12 = vsyncpa [#allocation4], 0
    // Predicated region
    $region2: #{tpu_custom_call.1} parent=1 // pred_check
      _
    $region3: #{tpu_custom_call.1} parent=1 // pred_check_branch
      %14 = sbr.rel (0) target = $region5
    $region4: #{tpu_custom_call.1} parent=1 // pred_region
      %s16 = ssub.s32 128, 128
      %17 = vsyncadd [#allocation3], %s16
      %s19 = sshll.u32 [#allocation2], 4
      %s20 = int_to_ptr.vmem [resolvable:$true] %s19
      %22 = dma.hbm_to_vmem [thread:$0]  %s0, 128, %s20, [#allocation3]
    $region5: #{tpu_custom_call.1} parent=1 // pred_fallthru
      _
    // Predicated region
    $region6: #{tpu_custom_call.1} parent=1 // pred_check
      _
    $region7: #{tpu_custom_call.1} parent=1 // pred_check_branch
      %24 = sbr.rel (0) target = $region9
    $region8: #{tpu_custom_call.1} parent=1 // pred_region
      %s26 = ssub.s32 512, 512
      %27 = vsyncadd [#allocation6], %s26
      %s28 = sshll.u32 [#allocation5], 4
      %s29 = int_to_ptr.vmem [resolvable:$true] %s28
      %34 = dma.hbm_to_vmem [thread:$0]  %s1, 512, %s29, [#allocation6], 128, 128, 8
    $region9: #{tpu_custom_call.1} parent=1 // pred_fallthru
      _
    // Predicated region
    $region10: #{tpu_custom_call.1} parent=1 // pred_check
      _
    $region11: #{tpu_custom_call.1} parent=1 // pred_check_branch
      %36 = sbr.rel (0) target = $region13
    $region12: #{tpu_custom_call.1} parent=1 // pred_region
      _
    $region13: #{tpu_custom_call.1} parent=1 // pred_fallthru
      _
    // Predicated region
    $region14: #{tpu_custom_call.1} parent=1 // pred_check
      _
    $region15: #{tpu_custom_call.1} parent=1 // pred_check_branch
      %38 = sbr.rel (0) target = $region17
    $region16: #{tpu_custom_call.1} parent=1 // pred_region
      %s40 = ssub.s32 768, 768
      %41 = vsyncadd [#allocation6], %s40
      %s42 = sshll.u32 [#allocation7], 4
      %s43 = int_to_ptr.vmem [resolvable:$true] %s42
      %48 = dma.hbm_to_vmem [thread:$0]  %s3, 768, %s43, [#allocation6], 128, 128, 8
    $region17: #{tpu_custom_call.1} parent=1 // pred_fallthru
      _
    // Predicated region
    $region18: #{tpu_custom_call.1} parent=1 // pred_check
      _
    $region19: #{tpu_custom_call.1} parent=1 // pred_check_branch
      %50 = sbr.rel (0) target = $region21
    $region20: #{tpu_custom_call.1} parent=1 // pred_region
      _
    $region21: #{tpu_custom_call.1} parent=1 // pred_fallthru
      _
    // Predicated region
    $region22: #{tpu_custom_call.1} parent=1 // pred_check
      _
    $region23: #{tpu_custom_call.1} parent=1 // pred_check_branch
      %52 = sbr.rel (0) target = $region25
    $region24: #{tpu_custom_call.1} parent=1 // pred_region
      %53 = dma.done [#allocation3], 128
    $region25: #{tpu_custom_call.1} parent=1 // pred_fallthru
      _
    // Predicated region
    $region26: #{tpu_custom_call.1} parent=1 // pred_check
      _
    $region27: #{tpu_custom_call.1} parent=1 // pred_check_branch
      %55 = sbr.rel (0) target = $region29
    $region28: #{tpu_custom_call.1} parent=1 // pred_region
      %56 = dma.done [#allocation6], 512
    $region29: #{tpu_custom_call.1} parent=1 // pred_fallthru
      _
    // Predicated region
    $region30: #{tpu_custom_call.1} parent=1 // pred_check
      _
    $region31: #{tpu_custom_call.1} parent=1 // pred_check_branch
      %58 = sbr.rel (0) target = $region33
    $region32: #{tpu_custom_call.1} parent=1 // pred_region
      %59 = dma.done [#allocation6], 768
    $region33: #{tpu_custom_call.1} parent=1 // pred_fallthru
      _
    %v60 = vld [vmem:[#allocation2] sm:$0xff]
    %v61 = vld [vmem:[#allocation5] sm:$0xff]
    %v62 = vld [vmem:[#allocation5 + $0x8] sm:$0xff]
    %v63 = vld [vmem:[#allocation5 + $0x10] sm:$0xff]
    %v64 = vld [vmem:[#allocation5 + $0x18] sm:$0xff]
    %v65 = vld [vmem:[%s2] sm:$0x1]
    %v67 = vlaneseq
    %v68 = vshrl.u32 %v67, 7
    %v69 = vsub.s32 0, %v68
    %v70 = vrot.slane %v65, %v69
    %vm72 = vcmask 261120
    %v74 = vsel %vm72, %v60, 0
    %76 = vmatprep.subr.mxu0 0.0
    %77 = vmatpush1.msra.mxu0 %v61
    %78 = vmatprep.subr.mxu0 0.0
    %79 = vmatpush1.msra.mxu0 %v62
    %80 = vmatprep.subr.mxu0 0.0
    %81 = vmatpush1.msra.mxu0 %v63
    %82 = vmatprep.subr.mxu0 0.0
    %83 = vmatpush1.msra.mxu0 %v64
    %84 = vmatprep.subr.mxu0 0.0
    %85 = vmatpush1.msra.mxu0 0.0
    %86 = vmatprep.subr.mxu0 0.0
    %87 = vmatpush1.msra.mxu0 0.0
    %88 = vmatprep.subr.mxu0 0.0
    %89 = vmatpush1.msra.mxu0 0.0
    %90 = vmatprep.subr.mxu0 0.0
    %91 = vmatpush1.msra.mxu0 0.0
    %92 = vmatprep.subr.mxu0 0.0
    %93 = vmatpush1.msra.mxu0 0.0
    %94 = vmatprep.subr.mxu0 0.0
    %95 = vmatpush1.msra.mxu0 0.0
    %96 = vmatprep.subr.mxu0 0.0
    %97 = vmatpush1.msra.mxu0 0.0
    %98 = vmatprep.subr.mxu0 0.0
    %99 = vmatpush1.msra.mxu0 0.0
    %100 = vmatprep.subr.mxu0 0.0
    %101 = vmatpush1.msra.mxu0 0.0
    %102 = vmatprep.subr.mxu0 0.0
    %103 = vmatpush1.msra.mxu0 0.0
    %104 = vmatprep.subr.mxu0 0.0
    %105 = vmatpush1.msra.mxu0 0.0
    %106 = vmatprep.subr.mxu0 0.0
    %107 = vmatpush1.msra.mxu0 0.0
    %108 = vmatprep.subr.mxu0 0.0
    %109 = vmatpush1.msra.mxu0 0.0
    %110 = vmatprep.subr.mxu0 0.0
    %111 = vmatpush1.msra.mxu0 0.0
    %112 = vmatprep.subr.mxu0 0.0
    %113 = vmatpush1.msra.mxu0 0.0
    %114 = vmatprep.subr.mxu0 0.0
    %115 = vmatpush1.msra.mxu0 0.0
    %116 = vmatprep.subr.mxu0 0.0
    %117 = vmatpush1.msra.mxu0 0.0
    %118 = vmatprep.subr.mxu0 0.0
    %119 = vmatpush1.msra.mxu0 0.0
    %120 = vmatprep.subr.mxu0 0.0
    %121 = vmatpush1.msra.mxu0 0.0
    %122 = vmatprep.subr.mxu0 0.0
    %123 = vmatpush1.msra.mxu0 0.0
    %124 = vmatprep.subr.mxu0 0.0
    %125 = vmatpush1.msra.mxu0 0.0
    %126 = vmatprep.subr.mxu0 0.0
    %127 = vmatpush1.msra.mxu0 0.0
    %128 = vmatprep.subr.mxu0 0.0
    %129 = vmatpush1.msra.mxu0 0.0
    %130 = vmatprep.subr.mxu0 0.0
    %131 = vmatpush1.msra.mxu0 0.0
    %132 = vmatprep.subr.mxu0 0.0
    %133 = vmatpush1.msra.mxu0 0.0
    %134 = vmatprep.subr.mxu0 0.0
    %135 = vmatpush1.msra.mxu0 0.0
    %136 = vmatprep.subr.mxu0 0.0
    %137 = vmatpush1.msra.mxu0 0.0
    %138 = vmatprep.subr.mxu0 0.0
    %139 = vmatpush1.msra.mxu0 0.0
    %140 = vmatprep.mubr.f32.mxu0 0.0
    %141 = vmatmul.mubr.f32.gmra.mrb[0].mxu0 %v74
    %v142 = vpop.f32.mrb[0].mxu0
    %v143 = vadd.f32 %v70, %v142
    %v144 = vpop.f32.mrb[0].mxu0
    %145 = vdwg.mxu0
    %v146 = vmax.f32 %v143, 0.0
    %v147 = vld [vmem:[#allocation7] sm:$0xff]
    %v148 = vld [vmem:[#allocation7 + $0x8] sm:$0xff]
    %v149 = vld [vmem:[#allocation7 + $0x10] sm:$0xff]
    %v150 = vld [vmem:[#allocation7 + $0x18] sm:$0xff]
    %v151 = vld [vmem:[#allocation7 + $0x20] sm:$0xff]
    %v152 = vld [vmem:[#allocation7 + $0x28] sm:$0xff]
    %v153 = vld [vmem:[%s4] sm:$0x1]
    %v155 = vlaneseq
    %v156 = vshrl.u32 %v155, 7
    %v157 = vsub.s32 0, %v156
    %v158 = vrot.slane %v153, %v157
    %vm160 = vcmask 392192
    %v162 = vsel %vm160, %v146, 0
    %164 = vmatprep.subr.mxu0 0.0
    %165 = vmatpush1.msra.mxu0 %v147
    %166 = vmatprep.subr.mxu0 0.0
    %167 = vmatpush1.msra.mxu0 %v148
    %168 = vmatprep.subr.mxu0 0.0
    %169 = vmatpush1.msra.mxu0 %v149
    %170 = vmatprep.subr.mxu0 0.0
    %171 = vmatpush1.msra.mxu0 %v150
    %172 = vmatprep.subr.mxu0 0.0
    %173 = vmatpush1.msra.mxu0 %v151
    %174 = vmatprep.subr.mxu0 0.0
    %175 = vmatpush1.msra.mxu0 %v152
    %176 = vmatprep.subr.mxu0 0.0
    %177 = vmatpush1.msra.mxu0 0.0
    %178 = vmatprep.subr.mxu0 0.0
    %179 = vmatpush1.msra.mxu0 0.0
    %180 = vmatprep.subr.mxu0 0.0
    %181 = vmatpush1.msra.mxu0 0.0
    %182 = vmatprep.subr.mxu0 0.0
    %183 = vmatpush1.msra.mxu0 0.0
    %184 = vmatprep.subr.mxu0 0.0
    %185 = vmatpush1.msra.mxu0 0.0
    %186 = vmatprep.subr.mxu0 0.0
    %187 = vmatpush1.msra.mxu0 0.0
    %188 = vmatprep.subr.mxu0 0.0
    %189 = vmatpush1.msra.mxu0 0.0
    %190 = vmatprep.subr.mxu0 0.0
    %191 = vmatpush1.msra.mxu0 0.0
    %192 = vmatprep.subr.mxu0 0.0
    %193 = vmatpush1.msra.mxu0 0.0
    %194 = vmatprep.subr.mxu0 0.0
    %195 = vmatpush1.msra.mxu0 0.0
    %196 = vmatprep.subr.mxu0 0.0
    %197 = vmatpush1.msra.mxu0 0.0
    %198 = vmatprep.subr.mxu0 0.0
    %199 = vmatpush1.msra.mxu0 0.0
    %200 = vmatprep.subr.mxu0 0.0
    %201 = vmatpush1.msra.mxu0 0.0
    %202 = vmatprep.subr.mxu0 0.0
    %203 = vmatpush1.msra.mxu0 0.0
    %204 = vmatprep.subr.mxu0 0.0
    %205 = vmatpush1.msra.mxu0 0.0
    %206 = vmatprep.subr.mxu0 0.0
    %207 = vmatpush1.msra.mxu0 0.0
    %208 = vmatprep.subr.mxu0 0.0
    %209 = vmatpush1.msra.mxu0 0.0
    %210 = vmatprep.subr.mxu0 0.0
    %211 = vmatpush1.msra.mxu0 0.0
    %212 = vmatprep.subr.mxu0 0.0
    %213 = vmatpush1.msra.mxu0 0.0
    %214 = vmatprep.subr.mxu0 0.0
    %215 = vmatpush1.msra.mxu0 0.0
    %216 = vmatprep.subr.mxu0 0.0
    %217 = vmatpush1.msra.mxu0 0.0
    %218 = vmatprep.subr.mxu0 0.0
    %219 = vmatpush1.msra.mxu0 0.0
    %220 = vmatprep.subr.mxu0 0.0
    %221 = vmatpush1.msra.mxu0 0.0
    %222 = vmatprep.subr.mxu0 0.0
    %223 = vmatpush1.msra.mxu0 0.0
    %224 = vmatprep.subr.mxu0 0.0
    %225 = vmatpush1.msra.mxu0 0.0
    %226 = vmatprep.subr.mxu0 0.0
    %227 = vmatpush1.msra.mxu0 0.0
    %228 = vmatprep.mubr.f32.mxu0 0.0
    %229 = vmatmul.mubr.f32.gmra.mrb[0].mxu0 %v162
    %v230 = vpop.f32.mrb[0].mxu0
    %v231 = vadd.f32 %v158, %v230
    %v232 = vpop.f32.mrb[0].mxu0
    %233 = vdwg.mxu0
    %234 = vst [vmem:[#allocation8] sm:$0xff] %v231
    // Predicated region
    $region34: #{tpu_custom_call.1} parent=1 // pred_check
      _
    $region35: #{tpu_custom_call.1} parent=1 // pred_check_branch
      %236 = sbr.rel (0) target = $region37
    $region36: #{tpu_custom_call.1} parent=1 // pred_region
      %s238 = ssub.s32 128, 128
      %239 = vsyncadd [#allocation4], %s238
      %s241 = sshll.u32 [#allocation8], 4
      %s242 = int_to_ptr.vmem [resolvable:$true] %s241
      %244 = dma.vmem_to_hbm [thread:$0]  %s242, 128, %s5, [#allocation4]
    $region37: #{tpu_custom_call.1} parent=1 // pred_fallthru
      _
    // Predicated region
    $region38: #{tpu_custom_call.1} parent=1 // pred_check
      _
    $region39: #{tpu_custom_call.1} parent=1 // pred_check_branch
      %246 = sbr.rel (0) target = $region41
    $region40: #{tpu_custom_call.1} parent=1 // pred_region
      %247 = dma.done [#allocation4], 128
    $region41: #{tpu_custom_call.1} parent=1 // pred_fallthru
      _
    %248 = vsyncpa [#allocation3], 1
    %249 = vsyncpa [#allocation6], 1
    %250 = vsyncpa [#allocation4], 1

</llo_original>
